<compile_context>
chip_gen: v7x
topology: tpu7x:2x2x1
jax: 0.10.0
libtpu: 0.0.40
codegen_flags: <defaults>
</compile_context>

<pallas_src>
import functools
import math

import jax
import jax.numpy as jnp
from jax.experimental import pallas as pl
from jax.experimental.pallas import tpu as pltpu


_INV_SQRT2 = 1.0 / math.sqrt(2.0)


# --------------------------------------------------------------------------
# Kernels
# --------------------------------------------------------------------------
def _gelu_f32(h, approximate):
    if approximate:
        # tanh form -> EUP (otherwise-idle slot); off by default to match torch.
        return jax.nn.gelu(h, approximate=True)
    return 0.5 * h * (1.0 + jax.lax.erf(h * jnp.float32(_INV_SQRT2)))


def _gated_proj_partial(x, wfc, wfc2, wproj, approximate):
    """(gelu(x@wfc) * (x@wfc2)) @ wproj with f32 accumulation on the MXU."""
    h1 = jnp.dot(x, wfc, preferred_element_type=jnp.float32)
    h2 = jnp.dot(x, wfc2, preferred_element_type=jnp.float32)
    h = (_gelu_f32(h1, approximate) * h2).astype(wproj.dtype)
    return jnp.dot(h, wproj, preferred_element_type=jnp.float32)


def _mlp_resident_kernel(x_ref, wfc_ref, wfc2_ref, wproj_ref, o_ref, *,
                         approximate):
    """Weights fully VMEM-resident; one row tile per grid step, no reduction axis."""
    o_ref[...] = _gated_proj_partial(
        x_ref[...], wfc_ref[...], wfc2_ref[...], wproj_ref[...], approximate
    ).astype(o_ref.dtype)


def _mlp_streaming_kernel(x_ref, wfc_ref, wfc2_ref, wproj_ref, o_ref, acc_ref,
                          *, approximate):
    """Hidden dim streamed in tiles; f32 accumulator over the j (reduction) axis."""
    j = pl.program_id(1)

    @pl.when(j == 0)
    def _init():
        acc_ref[...] = jnp.zeros_like(acc_ref)

    acc_ref[...] += _gated_proj_partial(
        x_ref[...], wfc_ref[...], wfc2_ref[...], wproj_ref[...], approximate)

    @pl.when(j == pl.num_programs(1) - 1)
    def _writeback():
        o_ref[...] = acc_ref[...].astype(o_ref.dtype)


# --------------------------------------------------------------------------
# Host-side helpers
# --------------------------------------------------------------------------
def _round_up(x, m):
    return ((x + m - 1) // m) * m


def _sublane_multiple(dtype):
    # f32 -> 8, bf16 -> 16, int8/fp8 -> 32
    return max(8, 32 // jnp.dtype(dtype).itemsize)


def _vmem_budget_bytes():
    cap = 64 * 1024 * 1024  # conservative fallback (v7x physical VMEM per TC)
    try:
        info = pltpu.get_tpu_info()
        cap = int(getattr(info, "vmem_capacity_bytes", cap))
    except Exception:
        pass
    # Leave headroom for compiler-internal scratch: ~112 MiB on 128 MiB chips,
    # ~56 MiB on v7x.
    return cap - max(8 * 1024 * 1024, cap // 8)


def mlp_pallas(x, w_fc, w_fc2, w_proj, *, tm=256, tn=None,
               matmul_dtype=jnp.bfloat16, gelu_approximate=False,
               force_streaming=False):
    """x: (B, T, C). Weights in (in_features, out_features) layout.

    matmul_dtype: dtype of the MXU operands (default bf16, f32 accumulation in
    kernel).  Pass jnp.float32 (or None to keep x.dtype) to bit-match torch.
    """
    B, T, C = x.shape
    Cin, H = w_fc.shape
    assert Cin == C and w_fc2.shape == (C, H) and w_proj.shape == (H, C)

    out_dtype = x.dtype
    mm_dtype = jnp.dtype(matmul_dtype) if matmul_dtype is not None else jnp.dtype(x.dtype)
    in_bytes = mm_dtype.itemsize
    out_bytes = jnp.dtype(out_dtype).itemsize

    # --- pad hidden dim to a lane multiple (zero cols/rows contribute 0) -----
    H_pad = _round_up(H, 128)
    if H_pad != H:
        w_fc = jnp.pad(w_fc, ((0, 0), (0, H_pad - H)))
        w_fc2 = jnp.pad(w_fc2, ((0, 0), (0, H_pad - H)))
        w_proj = jnp.pad(w_proj, ((0, H_pad - H), (0, 0)))

    # --- row tiling (sublane-legal for the matmul dtype) ----------------------
    M = B * T
    sub = _sublane_multiple(mm_dtype)
    tm_eff = max(sub, min(_round_up(tm, sub), _round_up(M, sub)))
    M_pad = _round_up(M, tm_eff)
    # Guarantee >= 2 blocks on the parallel i axis when possible so both v7x
    # TensorCores get work (harmless on single-TC v5e/v6e).
    if M_pad // tm_eff < 2 and tm_eff > sub:
        tm_eff = max(sub, _round_up(tm_eff // 2, sub))
        M_pad = _round_up(M, tm_eff)
    grid_i = M_pad // tm_eff

    x2d = x.reshape(M, C)
    if M_pad != M:
        x2d = jnp.pad(x2d, ((0, M_pad - M), (0, 0)))  # zero rows -> zero out, sliced off

    x2d = x2d.astype(mm_dtype)
    w_fc = w_fc.astype(mm_dtype)
    w_fc2 = w_fc2.astype(mm_dtype)
    w_proj = w_proj.astype(mm_dtype)

    budget = _vmem_budget_bytes()
    xo_tiles = 2 * tm_eff * C * (in_bytes + out_bytes)   # double-buffered x/out tiles

    # --- resident-weights fast path -------------------------------------------
    resident_need = (
        2 * 3 * C * H_pad * in_bytes      # full weights (default double-buffered alloc)
        + xo_tiles
        + 4 * tm_eff * H_pad * 4          # f32 (tm, H) intermediates headroom
    )
    use_resident = (not force_streaming) and resident_need <= budget

    if use_resident:
        out2d = pl.pallas_call(
            functools.partial(_mlp_resident_kernel, approximate=gelu_approximate),
            out_shape=jax.ShapeDtypeStruct((M_pad, C), out_dtype),
            grid_spec=pltpu.PrefetchScalarGridSpec(
                num_scalar_prefetch=0,
                grid=(grid_i,),
                in_specs=[
                    pl.BlockSpec((tm_eff, C), lambda i: (i, 0)),   # x row tile
                    pl.BlockSpec((C, H_pad), lambda i: (0, 0)),    # W_fc   (resident)
                    pl.BlockSpec((C, H_pad), lambda i: (0, 0)),    # W_fc2  (resident)
                    pl.BlockSpec((H_pad, C), lambda i: (0, 0)),    # W_proj (resident)
                ],
                out_specs=pl.BlockSpec((tm_eff, C), lambda i: (i, 0)),
            ),
            compiler_params=pltpu.CompilerParams(
                dimension_semantics=("parallel",),
                vmem_limit_bytes=int(budget),
            ),
        )(x2d, w_fc, w_fc2, w_proj)
        return out2d[:M].reshape(B, T, C)

    # --- streaming fallback: reduce over hidden-dim tiles ----------------------
    n_wbuf = 3  # triple-buffer the weight-slice DMAs (they are the exposed path)
    if tn is None:
        tn = 128
        for cand in (2048, 1024, 512, 256, 128):
            need = (2 * tm_eff * C * in_bytes
                    + n_wbuf * 3 * C * cand * in_bytes
                    + 2 * tm_eff * C * out_bytes
                    + tm_eff * C * 4
                    + 4 * tm_eff * cand * 4)
            if H_pad % cand == 0 and need <= budget:
                tn = cand
                break
    assert H_pad % tn == 0, "hidden tile must divide the (padded) hidden dim"
    grid_j = H_pad // tn
    wbuf = pl.Buffered(n_wbuf)

    out2d = pl.pallas_call(
        functools.partial(_mlp_streaming_kernel, approximate=gelu_approximate),
        out_shape=jax.ShapeDtypeStruct((M_pad, C), out_dtype),
        grid_spec=pltpu.PrefetchScalarGridSpec(
            num_scalar_prefetch=0,
            grid=(grid_i, grid_j),
            in_specs=[
                pl.BlockSpec((tm_eff, C), lambda i, j: (i, 0)),                      # x rows
                pl.BlockSpec((C, tn), lambda i, j: (0, j), pipeline_mode=wbuf),      # W_fc
                pl.BlockSpec((C, tn), lambda i, j: (0, j), pipeline_mode=wbuf),      # W_fc2
                pl.BlockSpec((tn, C), lambda i, j: (j, 0), pipeline_mode=wbuf),      # W_proj
            ],
            out_specs=pl.BlockSpec((tm_eff, C), lambda i, j: (i, 0)),
            scratch_shapes=[pltpu.VMEM((tm_eff, C), jnp.float32)],
        ),
        compiler_params=pltpu.CompilerParams(
            dimension_semantics=("parallel", "arbitrary"),
            vmem_limit_bytes=int(budget),
        ),
    )(x2d, w_fc, w_fc2, w_proj)

    return out2d[:M].reshape(B, T, C)


# --------------------------------------------------------------------------
# Reference + tests
# --------------------------------------------------------------------------
def mlp_reference(x, w_fc, w_fc2, w_proj):
    h1 = x @ w_fc
    h2 = x @ w_fc2
    g = 0.5 * h1 * (1.0 + jax.lax.erf(h1 / jnp.sqrt(2.0).astype(h1.dtype)))
    return (g * h2) @ w_proj


def _make_params(key, n_embd, hidden):
    k1, k2, k3 = jax.random.split(key, 3)
    bound_fc = 1.0 / math.sqrt(n_embd)
    bound_pr = 1.0 / math.sqrt(hidden)
    w_fc = jax.random.uniform(k1, (n_embd, hidden), jnp.float32, -bound_fc, bound_fc)
    w_fc2 = jax.random.uniform(k2, (n_embd, hidden), jnp.float32, -bound_fc, bound_fc)
    w_proj = jax.random.uniform(k3, (hidden, n_embd), jnp.float32, -bound_pr, bound_pr)
    return w_fc, w_fc2, w_proj


if __name__ == "__main__":
    key = jax.random.PRNGKey(0)

    # --- Test 1: tiny config, f32 operands (bit-match path), resident weights --
    n_embd, B, T = 32, 2, 8
    hidden = 4 * n_embd
    kx, kp = jax.random.split(key)
    x = jax.random.normal(kx, (B, T, n_embd), dtype=jnp.float32)
    w_fc, w_fc2, w_proj = _make_params(kp, n_embd, hidden)

    out = jax.block_until_ready(
        mlp_pallas(x, w_fc, w_fc2, w_proj, matmul_dtype=jnp.float32))
    ref = mlp_reference(x, w_fc, w_fc2, w_proj)
    assert out.shape == (B, T, n_embd)
    assert jnp.allclose(out, ref, atol=1e-5, rtol=1e-5), "mismatch vs reference (test 1)"

    # --- Test 2: default bf16 operands, resident weights, >=2 row blocks ------
    n_embd2, B2, T2 = 128, 2, 96           # M = 192
    hidden2 = 4 * n_embd2                  # 512
    kx2, kp2 = jax.random.split(jax.random.PRNGKey(1))
    x2 = jax.random.normal(kx2, (B2, T2, n_embd2), dtype=jnp.float32)
    w_fc_2, w_fc2_2, w_proj_2 = _make_params(kp2, n_embd2, hidden2)
    ref2 = mlp_reference(x2, w_fc_2, w_fc2_2, w_proj_2)

    out2 = jax.block_until_ready(mlp_pallas(x2, w_fc_2, w_fc2_2, w_proj_2))
    assert out2.shape == (B2, T2, n_embd2)
    err = float(jnp.max(jnp.abs(out2 - ref2)))
    scale = float(jnp.max(jnp.abs(ref2)))
    assert err <= 0.02 * scale + 1e-3, f"bf16 mismatch vs reference (test 2): {err} vs scale {scale}"

    # --- Test 3: forced streaming path (hidden-dim accumulation, Buffered(3)) --
    out3 = jax.block_until_ready(
        mlp_pallas(x2, w_fc_2, w_fc2_2, w_proj_2, matmul_dtype=jnp.float32,
                   force_streaming=True, tn=128))
    assert out3.shape == (B2, T2, n_embd2)
    assert jnp.allclose(out3, ref2, atol=1e-4, rtol=1e-4), "mismatch vs reference (test 3)"

    print("KERNEL_OK")
</pallas_src>

<mosaic_0001>
module attributes {stable_mosaic.version = 11 : i64} {
  func.func @_mlp_resident_kernel(%arg0: i32, %arg1: memref<8x32xf32, #tpu.memory_space<vmem>>, %arg2: memref<32x128xf32, #tpu.memory_space<vmem>>, %arg3: memref<32x128xf32, #tpu.memory_space<vmem>>, %arg4: memref<128x32xf32, #tpu.memory_space<vmem>>, %arg5: memref<8x32xf32, #tpu.memory_space<vmem>>) attributes {dimension_semantics = [#tpu.dimension_semantics<parallel>], iteration_bounds = array<i64: 2>, scalar_prefetch = 0 : i64, scratch_operands = 0 : i64, tpu.core_type = #tpu.core_type<tc>, window_params = [{transform_indices = @transform_0, window_bounds = array<i64: 8, 32>}, {pipeline_mode = #tpu.pipeline_mode<synchronous>, transform_indices = @transform_1, window_bounds = array<i64: 32, 128>}, {pipeline_mode = #tpu.pipeline_mode<synchronous>, transform_indices = @transform_2, window_bounds = array<i64: 32, 128>}, {pipeline_mode = #tpu.pipeline_mode<synchronous>, transform_indices = @transform_3, window_bounds = array<i64: 128, 32>}, {transform_indices = @transform_4, window_bounds = array<i64: 8, 32>}]} {
    %c0 = arith.constant 0 : index
    %c0_0 = arith.constant 0 : index
    %0 = vector.load %arg1[%c0, %c0_0] : memref<8x32xf32, #tpu.memory_space<vmem>>, vector<8x32xf32>
    %c0_1 = arith.constant 0 : index
    %c0_2 = arith.constant 0 : index
    %1 = vector.load %arg2[%c0_1, %c0_2] : memref<32x128xf32, #tpu.memory_space<vmem>>, vector<32x128xf32>
    %c0_3 = arith.constant 0 : index
    %c0_4 = arith.constant 0 : index
    %2 = vector.load %arg3[%c0_3, %c0_4] : memref<32x128xf32, #tpu.memory_space<vmem>>, vector<32x128xf32>
    %c0_5 = arith.constant 0 : index
    %c0_6 = arith.constant 0 : index
    %3 = vector.load %arg4[%c0_5, %c0_6] : memref<128x32xf32, #tpu.memory_space<vmem>>, vector<128x32xf32>
    %cst = arith.constant dense<0.000000e+00> : vector<8x128xf32>
    %4 = tpu.matmul %0, %1, %cst {dimension_numbers = #tpu.dot_dimension_numbers<[1], [0], [0], [1], [0, 0, 1, 1], [], []>} : vector<8x32xf32>, vector<32x128xf32>, vector<8x128xf32> -> vector<8x128xf32>
    %cst_7 = arith.constant dense<0.000000e+00> : vector<8x128xf32>
    %5 = tpu.matmul %0, %2, %cst_7 {dimension_numbers = #tpu.dot_dimension_numbers<[1], [0], [0], [1], [0, 0, 1, 1], [], []>} : vector<8x32xf32>, vector<32x128xf32>, vector<8x128xf32> -> vector<8x128xf32>
    %cst_8 = arith.constant 5.000000e-01 : f32
    %6 = vector.broadcast %cst_8 : f32 to vector<8x128xf32>
    %7 = arith.mulf %6, %4 : vector<8x128xf32>
    %cst_9 = arith.constant 0.707106769 : f32
    %8 = vector.broadcast %cst_9 : f32 to vector<8x128xf32>
    %9 = arith.mulf %4, %8 : vector<8x128xf32>
    %10 = math.erf %9 : vector<8x128xf32>
    %cst_10 = arith.constant 1.000000e+00 : f32
    %11 = vector.broadcast %cst_10 : f32 to vector<8x128xf32>
    %12 = arith.addf %11, %10 : vector<8x128xf32>
    %13 = arith.mulf %7, %12 : vector<8x128xf32>
    %14 = arith.mulf %13, %5 : vector<8x128xf32>
    %cst_11 = arith.constant dense<0.000000e+00> : vector<8x32xf32>
    %15 = tpu.matmul %14, %3, %cst_11 {dimension_numbers = #tpu.dot_dimension_numbers<[1], [0], [0], [1], [0, 0, 1, 1], [], []>} : vector<8x128xf32>, vector<128x32xf32>, vector<8x32xf32> -> vector<8x32xf32>
    %c0_12 = arith.constant 0 : index
    %c0_13 = arith.constant 0 : index
    %16 = vector.load %arg5[%c0_12, %c0_13] : memref<8x32xf32, #tpu.memory_space<vmem>>, vector<8x32xf32>
    tpu.vector_store %arg5[%c0_12, %c0_13], %15 {strides = array<i32>} : memref<8x32xf32, #tpu.memory_space<vmem>>, vector<8x32xf32>,
    return
  }
  func.func @transform_0(%arg0: i32) -> (i32, i32) {
    %c0_i32 = arith.constant 0 : i32
    %c0_i32_0 = arith.constant 0 : i32
    return %arg0, %c0_i32 : i32, i32
  }
  func.func @transform_1(%arg0: i32) -> (i32, i32) {
    %c0_i32 = arith.constant 0 : i32
    %c0_i32_0 = arith.constant 0 : i32
    %c0_i32_1 = arith.constant 0 : i32
    return %c0_i32, %c0_i32_0 : i32, i32
  }
  func.func @transform_2(%arg0: i32) -> (i32, i32) {
    %c0_i32 = arith.constant 0 : i32
    %c0_i32_0 = arith.constant 0 : i32
    %c0_i32_1 = arith.constant 0 : i32
    return %c0_i32, %c0_i32_0 : i32, i32
  }
  func.func @transform_3(%arg0: i32) -> (i32, i32) {
    %c0_i32 = arith.constant 0 : i32
    %c0_i32_0 = arith.constant 0 : i32
    %c0_i32_1 = arith.constant 0 : i32
    return %c0_i32, %c0_i32_0 : i32, i32
  }
  func.func @transform_4(%arg0: i32) -> (i32, i32) {
    %c0_i32 = arith.constant 0 : i32
    %c0_i32_0 = arith.constant 0 : i32
    return %arg0, %c0_i32 : i32, i32
  }
}

</mosaic_0001>

<llo_original>
// kernel: tpu_custom_call.1
$region0: #{tpu_custom_call.1}
  #allocation0 [shape = 'u32[]', space=smem, size = 0x4, offset = 0x4, fixed_abs, tag = 'smem constant byte address 0x4 - core index']
  #allocation1 [shape = 'u32[144,128]{1,0:T(1,128)}', space=vmem, size = 0x12000, scoped, tag = 'internal scratch']
  %s0 = inlined_call_operand.vmem [shape: f32[16,32], index: 0, kind: input, shape index: {}]
  %s1 = inlined_call_operand.vmem [shape: f32[32,128], index: 1, kind: input, shape index: {}]
  %s2 = inlined_call_operand.vmem [shape: f32[32,128], index: 2, kind: input, shape index: {}]
  %s3 = inlined_call_operand.vmem [shape: f32[128,32], index: 3, kind: input, shape index: {}]
  %s4 = inlined_call_operand.hbm [shape: f32[16,32], index: 4, kind: output, shape index: {}]
  %s5 = sld [smem:[#allocation0]]
  $region49: #{tpu_custom_call.1} parent=0
    _
  %s7 = ssub.s32 1, %s5
  %s8 = scalar_select 0, %s7, %s5
  $region1: #{tpu_custom_call.1} parent=0
    #allocation2 [shape = 'u8[8192]{0}', space=vmem, size = 0x2000, scoped, tag = 'output window, operand 0']
    #allocation3 [shape = 's32[2]{0}', space=sflag, size = 0x8, scoped, tag = 'scoped memory for tpu_custom_call.1']
    %9 = vsyncpa [#allocation3], 0
    %s10 = scalar_lea.sflag [#allocation3], 1
    %11 = vsyncpa %s10, 0
    loop: start=0, step=1, limit=4
    $region2: #{tpu_custom_call.1} parent=1 // loop_pre_header
      _
    $region3: #{tpu_custom_call.1} parent=1 // loop_header
      %s13 = sphi 0, %s17
      %p14 = scmp.ge.s32.totalorder %s13, 4
      %s23 = sphi 0, %s25
      %s26 = sphi 0, %s23
      %s27 = sphi 0, %s26
      %s43 = sphi 0, %s27
      %s47 = sphi 0, %s47
      %s49 = sphi 0, %s47
      %s50 = sphi 0, %s49
      %s64 = sphi 0, %s50
      %s68 = sphi 0, %s68
      %s70 = sphi 0, %s68
      %s71 = sphi 0, %s70
      %s85 = sphi 0, %s71
      %s89 = sphi 0, %s89
      %s91 = sphi 0, %s89
      %s92 = sphi 0, %s91
      %s106 = sphi 0, %s92
      %s112 = sphi 0, %s114
      %s115 = sphi 0, %s112
      %s116 = sphi 0, %s115
      %s132 = sphi 0, %s116
    $region4: #{tpu_custom_call.1} parent=1 // loop_header_branch
      %16 = sbr.rel (%p14) target = $region8
    $region5: #{tpu_custom_call.1} parent=1 // loop_body
      %s18 = ssub.s32 %s13, 1
      %s19 = ssub.s32 %s13, 2
      %s20 = sadd.s32 %s13, 1
      %s21 = ssub.s32 %s13, %s20
      %p22 = scmp.eq.s32.totalorder %s21, 0
      %s24 = sadd.s32 %s23, 1
      %s25 = scalar_select %p22, %s23, %s24
      %p28 = pneg %p22
      %p29 = scmp.eq.s32.totalorder %s13, 1
      %p30 = por %p28, %p29
      %p31 = scmp.ne.s32.totalorder %s23, %s26
      %p32 = scmp.eq.s32.totalorder %s13, 0
      %p33 = por %p31, %p32
      %p34 = scmp.ne.s32.totalorder %s23, %s26
      %p35 = scmp.eq.s32.totalorder %s18, 1
      %p36 = por %p34, %p35
      %p37 = scmp.ne.s32.totalorder %s26, %s27
      %p38 = scmp.eq.s32.totalorder %s18, 0
      %p39 = por %p37, %p38
      %p40 = scmp.ne.s32.totalorder %s26, %s27
      %p41 = scmp.eq.s32.totalorder %s19, 1
      %p42 = por %p40, %p41
      %p44 = scmp.ne.s32.totalorder %s27, %s43
      %p45 = scmp.eq.s32.totalorder %s19, 0
      %p46 = por %p44, %p45
      %s48 = sadd.s32 %s47, 1
      %p51 = scmp.eq.s32.totalorder %s13, 1
      %p52 = scmp.ne.s32.totalorder %s47, %s49
      %p53 = scmp.eq.s32.totalorder %s13, 0
      %p54 = por %p52, %p53
      %p55 = scmp.ne.s32.totalorder %s47, %s49
      %p56 = scmp.eq.s32.totalorder %s18, 1
      %p57 = por %p55, %p56
      %p58 = scmp.ne.s32.totalorder %s49, %s50
      %p59 = scmp.eq.s32.totalorder %s18, 0
      %p60 = por %p58, %p59
      %p61 = scmp.ne.s32.totalorder %s49, %s50
      %p62 = scmp.eq.s32.totalorder %s19, 1
      %p63 = por %p61, %p62
      %p65 = scmp.ne.s32.totalorder %s50, %s64
      %p66 = scmp.eq.s32.totalorder %s19, 0
      %p67 = por %p65, %p66
      %s69 = sadd.s32 %s68, 1
      %p72 = scmp.eq.s32.totalorder %s13, 1
      %p73 = scmp.ne.s32.totalorder %s68, %s70
      %p74 = scmp.eq.s32.totalorder %s13, 0
      %p75 = por %p73, %p74
      %p76 = scmp.ne.s32.totalorder %s68, %s70
      %p77 = scmp.eq.s32.totalorder %s18, 1
      %p78 = por %p76, %p77
      %p79 = scmp.ne.s32.totalorder %s70, %s71
      %p80 = scmp.eq.s32.totalorder %s18, 0
      %p81 = por %p79, %p80
      %p82 = scmp.ne.s32.totalorder %s70, %s71
      %p83 = scmp.eq.s32.totalorder %s19, 1
      %p84 = por %p82, %p83
      %p86 = scmp.ne.s32.totalorder %s71, %s85
      %p87 = scmp.eq.s32.totalorder %s19, 0
      %p88 = por %p86, %p87
      %s90 = sadd.s32 %s89, 1
      %p93 = scmp.eq.s32.totalorder %s13, 1
      %p94 = scmp.ne.s32.totalorder %s89, %s91
      %p95 = scmp.eq.s32.totalorder %s13, 0
      %p96 = por %p94, %p95
      %p97 = scmp.ne.s32.totalorder %s89, %s91
      %p98 = scmp.eq.s32.totalorder %s18, 1
      %p99 = por %p97, %p98
      %p100 = scmp.ne.s32.totalorder %s91, %s92
      %p101 = scmp.eq.s32.totalorder %s18, 0
      %p102 = por %p100, %p101
      %p103 = scmp.ne.s32.totalorder %s91, %s92
      %p104 = scmp.eq.s32.totalorder %s19, 1
      %p105 = por %p103, %p104
      %p107 = scmp.ne.s32.totalorder %s92, %s106
      %p108 = scmp.eq.s32.totalorder %s19, 0
      %p109 = por %p107, %p108
      %s110 = ssub.s32 %s13, %s20
      %p111 = scmp.eq.s32.totalorder %s110, 0
      %s113 = sadd.s32 %s112, 1
      %s114 = scalar_select %p111, %s112, %s113
      %p117 = pneg %p111
      %p118 = scmp.eq.s32.totalorder %s13, 1
      %p119 = por %p117, %p118
      %p120 = scmp.ne.s32.totalorder %s112, %s115
      %p121 = scmp.eq.s32.totalorder %s13, 0
      %p122 = por %p120, %p121
      %p123 = scmp.ne.s32.totalorder %s112, %s115
      %p124 = scmp.eq.s32.totalorder %s18, 1
      %p125 = por %p123, %p124
      %p126 = scmp.ne.s32.totalorder %s115, %s116
      %p127 = scmp.eq.s32.totalorder %s18, 0
      %p128 = por %p126, %p127
      %p129 = scmp.ne.s32.totalorder %s115, %s116
      %p130 = scmp.eq.s32.totalorder %s19, 1
      %p131 = por %p129, %p130
      %p133 = scmp.ne.s32.totalorder %s116, %s132
      %p134 = scmp.eq.s32.totalorder %s19, 0
      %p135 = por %p133, %p134
      %p136 = scmp.le.s32.totalorder 1, %s13
      %p137 = scmp.lt.s32.totalorder %s13, 3
      %p138 = pnand %p136, %p137
      %p139 = pneg %p138
      // Predicated region
      $region9: #{tpu_custom_call.1} parent=5 // pred_check
        _
      $region10: #{tpu_custom_call.1} parent=5 // pred_check_branch
        %141 = sbr.rel (%p138) target = $region12
      $region11: #{tpu_custom_call.1} parent=5 // pred_region
        %s142 = ssub.s32 %s13, 1
        // Predicated region
        $region13: #{tpu_custom_call.1} parent=11 // pred_check
          %p143 = pneg %p60
        $region14: #{tpu_custom_call.1} parent=11 // pred_check_branch
          %145 = sbr.rel (%p143) target = $region16
        $region15: #{tpu_custom_call.1} parent=11 // pred_region
          _
        $region16: #{tpu_custom_call.1} parent=11 // pred_fallthru
          _
        // Predicated region
        $region17: #{tpu_custom_call.1} parent=11 // pred_check
          %p146 = pneg %p81
        $region18: #{tpu_custom_call.1} parent=11 // pred_check_branch
          %148 = sbr.rel (%p146) target = $region20
        $region19: #{tpu_custom_call.1} parent=11 // pred_region
          _
        $region20: #{tpu_custom_call.1} parent=11 // pred_fallthru
          _
        // Predicated region
        $region21: #{tpu_custom_call.1} parent=11 // pred_check
          %p149 = pneg %p102
        $region22: #{tpu_custom_call.1} parent=11 // pred_check_branch
          %151 = sbr.rel (%p149) target = $region24
        $region23: #{tpu_custom_call.1} parent=11 // pred_region
          _
        $region24: #{tpu_custom_call.1} parent=11 // pred_fallthru
          _
      $region12: #{tpu_custom_call.1} parent=5 // pred_fallthru
        _
      %p152 = scmp.lt.s32.totalorder %s13, 2
      // Predicated region
      $region25: #{tpu_custom_call.1} parent=5 // pred_check
        %p153 = pneg %p152
      $region26: #{tpu_custom_call.1} parent=5 // pred_check_branch
        %155 = sbr.rel (%p153) target = $region28
      $region27: #{tpu_custom_call.1} parent=5 // pred_region
        // Predicated region
        $region29: #{tpu_custom_call.1} parent=27 // pred_check
          %p156 = pneg %p33
        $region30: #{tpu_custom_call.1} parent=27 // pred_check_branch
          %158 = sbr.rel (%p156) target = $region32
        $region31: #{tpu_custom_call.1} parent=27 // pred_region
          %p159 = scmp.lt.s32.totalorder %s13, 1
          %s160 = scalar_select %p159, %s13, 1
          %s161 = smul.addr %s160, 8
          %s162 = scalar_lea.vmem %s0, %s161
        $region32: #{tpu_custom_call.1} parent=27 // pred_fallthru
          _
      $region28: #{tpu_custom_call.1} parent=5 // pred_fallthru
        _
      %p163 = scmp.le.s32.totalorder 1, %s13
      %p164 = scmp.lt.s32.totalorder %s13, 3
      %p165 = pnand %p163, %p164
      %p166 = pneg %p165
      // Predicated region
      $region33: #{tpu_custom_call.1} parent=5 // pred_check
        _
      $region34: #{tpu_custom_call.1} parent=5 // pred_check_branch
        %168 = sbr.rel (%p165) target = $region36
      $region35: #{tpu_custom_call.1} parent=5 // pred_region
        %s169 = ssub.s32 %s13, 1
        %p170 = scmp.lt.s32.totalorder %s18, 1
        %s171 = scalar_select %p170, %s18, 1
        %s172 = smul.addr %s171, 8
        %s173 = scalar_lea.vmem %s0, %s172
        %p174 = pneg %p39
        %p175 = pneg %p36
        %p176 = pneg %p60
        %p177 = pneg %p57
        %p178 = pneg %p81
        %p179 = pneg %p78
        %p180 = pneg %p102
        %p181 = pneg %p99
        %p182 = pneg %p128
        %p183 = pneg %p125
        %s184 = sand.u32 %s115, 1
        %s185 = scalar_lea.sflag [#allocation3], %s184
        %s186 = sand.u32 %s115, 1
        %s187 = smul.addr %s186, 8
        %s188 = scalar_lea.vmem [#allocation2], %s187
        %p189 = scmp.lt.s32.totalorder %s18, 1
        %s190 = scalar_select %p189, %s18, 1
        %s191 = smul.addr %s190, 8
        %s192 = scalar_lea.vmem %s0, %s191
        %v193 = vld [vmem:[%s192] sm:$0xff]
        %v194 = vld [vmem:[%s1] sm:$0xff]
        %v195 = vld [vmem:[%s1 + $0x8] sm:$0xff]
        %v196 = vld [vmem:[%s1 + $0x10] sm:$0xff]
        %v197 = vld [vmem:[%s1 + $0x18] sm:$0xff]
        %v198 = vld [vmem:[%s2] sm:$0xff]
        %v199 = vld [vmem:[%s2 + $0x8] sm:$0xff]
        %v200 = vld [vmem:[%s2 + $0x10] sm:$0xff]
        %v201 = vld [vmem:[%s2 + $0x18] sm:$0xff]
        %v202 = vld [vmem:[%s3] sm:$0xff]
        %v203 = vld [vmem:[%s3 + $0x8] sm:$0xff]
        %v204 = vld [vmem:[%s3 + $0x10] sm:$0xff]
        %v205 = vld [vmem:[%s3 + $0x18] sm:$0xff]
        %v206 = vld [vmem:[%s3 + $0x20] sm:$0xff]
        %v207 = vld [vmem:[%s3 + $0x28] sm:$0xff]
        %v208 = vld [vmem:[%s3 + $0x30] sm:$0xff]
        %v209 = vld [vmem:[%s3 + $0x38] sm:$0xff]
        %v210 = vld [vmem:[%s3 + $0x40] sm:$0xff]
        %v211 = vld [vmem:[%s3 + $0x48] sm:$0xff]
        %v212 = vld [vmem:[%s3 + $0x50] sm:$0xff]
        %v213 = vld [vmem:[%s3 + $0x58] sm:$0xff]
        %v214 = vld [vmem:[%s3 + $0x60] sm:$0xff]
        %v215 = vld [vmem:[%s3 + $0x68] sm:$0xff]
        %v216 = vld [vmem:[%s3 + $0x70] sm:$0xff]
        %v217 = vld [vmem:[%s3 + $0x78] sm:$0xff]
        %vm218 = vcmask 261120
        %v220 = vsel %vm218, %v193, 0
        %222 = vmatprep.subr.mxu0 0.0
        %223 = vmatpush1.msra.mxu0 %v194
        %224 = vmatprep.subr.mxu0 0.0
        %225 = vmatpush1.msra.mxu0 %v195
        %226 = vmatprep.subr.mxu0 0.0
        %227 = vmatpush1.msra.mxu0 %v196
        %228 = vmatprep.subr.mxu0 0.0
        %229 = vmatpush1.msra.mxu0 %v197
        %230 = vmatprep.subr.mxu0 0.0
        %231 = vmatpush1.msra.mxu0 0.0
        %232 = vmatprep.subr.mxu0 0.0
        %233 = vmatpush1.msra.mxu0 0.0
        %234 = vmatprep.subr.mxu0 0.0
        %235 = vmatpush1.msra.mxu0 0.0
        %236 = vmatprep.subr.mxu0 0.0
        %237 = vmatpush1.msra.mxu0 0.0
        %238 = vmatprep.subr.mxu0 0.0
        %239 = vmatpush1.msra.mxu0 0.0
        %240 = vmatprep.subr.mxu0 0.0
        %241 = vmatpush1.msra.mxu0 0.0
        %242 = vmatprep.subr.mxu0 0.0
        %243 = vmatpush1.msra.mxu0 0.0
        %244 = vmatprep.subr.mxu0 0.0
        %245 = vmatpush1.msra.mxu0 0.0
        %246 = vmatprep.subr.mxu0 0.0
        %247 = vmatpush1.msra.mxu0 0.0
        %248 = vmatprep.subr.mxu0 0.0
        %249 = vmatpush1.msra.mxu0 0.0
        %250 = vmatprep.subr.mxu0 0.0
        %251 = vmatpush1.msra.mxu0 0.0
        %252 = vmatprep.subr.mxu0 0.0
        %253 = vmatpush1.msra.mxu0 0.0
        %254 = vmatprep.subr.mxu0 0.0
        %255 = vmatpush1.msra.mxu0 0.0
        %256 = vmatprep.subr.mxu0 0.0
        %257 = vmatpush1.msra.mxu0 0.0
        %258 = vmatprep.subr.mxu0 0.0
        %259 = vmatpush1.msra.mxu0 0.0
        %260 = vmatprep.subr.mxu0 0.0
        %261 = vmatpush1.msra.mxu0 0.0
        %262 = vmatprep.subr.mxu0 0.0
        %263 = vmatpush1.msra.mxu0 0.0
        %264 = vmatprep.subr.mxu0 0.0
        %265 = vmatpush1.msra.mxu0 0.0
        %266 = vmatprep.subr.mxu0 0.0
        %267 = vmatpush1.msra.mxu0 0.0
        %268 = vmatprep.subr.mxu0 0.0
        %269 = vmatpush1.msra.mxu0 0.0
        %270 = vmatprep.subr.mxu0 0.0
        %271 = vmatpush1.msra.mxu0 0.0
        %272 = vmatprep.subr.mxu0 0.0
        %273 = vmatpush1.msra.mxu0 0.0
        %274 = vmatprep.subr.mxu0 0.0
        %275 = vmatpush1.msra.mxu0 0.0
        %276 = vmatprep.subr.mxu0 0.0
        %277 = vmatpush1.msra.mxu0 0.0
        %278 = vmatprep.subr.mxu0 0.0
        %279 = vmatpush1.msra.mxu0 0.0
        %280 = vmatprep.subr.mxu0 0.0
        %281 = vmatpush1.msra.mxu0 0.0
        %282 = vmatprep.subr.mxu0 0.0
        %283 = vmatpush1.msra.mxu0 0.0
        %284 = vmatprep.subr.mxu0 0.0
        %285 = vmatpush1.msra.mxu0 0.0
        %286 = vmatprep.mubr.f32.mxu0 0.0
        %287 = vmatmul.mubr.f32.gmra.mrb[0].mxu0 %v220
        %v288 = vpop.f32.mrb[0].mxu0
        %v289 = vadd.f32 0.0, %v288
        %v290 = vpop.f32.mrb[0].mxu0
        %291 = vdwg.mxu0
        %292 = vmatprep.subr.mxu0 0.0
        %293 = vmatpush1.msra.mxu0 %v198
        %294 = vmatprep.subr.mxu0 0.0
        %295 = vmatpush1.msra.mxu0 %v199
        %296 = vmatprep.subr.mxu0 0.0
        %297 = vmatpush1.msra.mxu0 %v200
        %298 = vmatprep.subr.mxu0 0.0
        %299 = vmatpush1.msra.mxu0 %v201
        %300 = vmatprep.subr.mxu0 0.0
        %301 = vmatpush1.msra.mxu0 0.0
        %302 = vmatprep.subr.mxu0 0.0
        %303 = vmatpush1.msra.mxu0 0.0
        %304 = vmatprep.subr.mxu0 0.0
        %305 = vmatpush1.msra.mxu0 0.0
        %306 = vmatprep.subr.mxu0 0.0
        %307 = vmatpush1.msra.mxu0 0.0
        %308 = vmatprep.subr.mxu0 0.0
        %309 = vmatpush1.msra.mxu0 0.0
        %310 = vmatprep.subr.mxu0 0.0
        %311 = vmatpush1.msra.mxu0 0.0
        %312 = vmatprep.subr.mxu0 0.0
        %313 = vmatpush1.msra.mxu0 0.0
        %314 = vmatprep.subr.mxu0 0.0
        %315 = vmatpush1.msra.mxu0 0.0
        %316 = vmatprep.subr.mxu0 0.0
        %317 = vmatpush1.msra.mxu0 0.0
        %318 = vmatprep.subr.mxu0 0.0
        %319 = vmatpush1.msra.mxu0 0.0
        %320 = vmatprep.subr.mxu0 0.0
        %321 = vmatpush1.msra.mxu0 0.0
        %322 = vmatprep.subr.mxu0 0.0
        %323 = vmatpush1.msra.mxu0 0.0
        %324 = vmatprep.subr.mxu0 0.0
        %325 = vmatpush1.msra.mxu0 0.0
        %326 = vmatprep.subr.mxu0 0.0
        %327 = vmatpush1.msra.mxu0 0.0
        %328 = vmatprep.subr.mxu0 0.0
        %329 = vmatpush1.msra.mxu0 0.0
        %330 = vmatprep.subr.mxu0 0.0
        %331 = vmatpush1.msra.mxu0 0.0
        %332 = vmatprep.subr.mxu0 0.0
        %333 = vmatpush1.msra.mxu0 0.0
        %334 = vmatprep.subr.mxu0 0.0
        %335 = vmatpush1.msra.mxu0 0.0
        %336 = vmatprep.subr.mxu0 0.0
        %337 = vmatpush1.msra.mxu0 0.0
        %338 = vmatprep.subr.mxu0 0.0
        %339 = vmatpush1.msra.mxu0 0.0
        %340 = vmatprep.subr.mxu0 0.0
        %341 = vmatpush1.msra.mxu0 0.0
        %342 = vmatprep.subr.mxu0 0.0
        %343 = vmatpush1.msra.mxu0 0.0
        %344 = vmatprep.subr.mxu0 0.0
        %345 = vmatpush1.msra.mxu0 0.0
        %346 = vmatprep.subr.mxu0 0.0
        %347 = vmatpush1.msra.mxu0 0.0
        %348 = vmatprep.subr.mxu0 0.0
        %349 = vmatpush1.msra.mxu0 0.0
        %350 = vmatprep.subr.mxu0 0.0
        %351 = vmatpush1.msra.mxu0 0.0
        %352 = vmatprep.subr.mxu0 0.0
        %353 = vmatpush1.msra.mxu0 0.0
        %354 = vmatprep.subr.mxu0 0.0
        %355 = vmatpush1.msra.mxu0 0.0
        %356 = vmatprep.mubr.f32.mxu0 0.0
        %357 = vmatmul.mubr.f32.gmra.mrb[0].mxu0 %v220
        %v358 = vpop.f32.mrb[0].mxu0
        %v359 = vadd.f32 0.0, %v358
        %v360 = vpop.f32.mrb[0].mxu0
        %361 = vdwg.mxu0
        %v362 = vmul.f32 %v289, 0.5
        %v363 = vmul.f32 %v289, 0.70710677
        %v364 = verf.f32.pop %v363
        %v365 = vadd.f32 %v364, 1.0
        %v366 = vmul.f32 %v362, %v365
        %v367 = vmul.f32 %v366, %v359
        %368 = vmatprep.subr.mxu0 0.0
        %369 = vmatpush1.msra.mxu0 %v202
        %370 = vmatprep.subr.mxu0 0.0
        %371 = vmatpush1.msra.mxu0 %v203
        %372 = vmatprep.subr.mxu0 0.0
        %373 = vmatpush1.msra.mxu0 %v204
        %374 = vmatprep.subr.mxu0 0.0
        %375 = vmatpush1.msra.mxu0 %v205
        %376 = vmatprep.subr.mxu0 0.0
        %377 = vmatpush1.msra.mxu0 %v206
        %378 = vmatprep.subr.mxu0 0.0
        %379 = vmatpush1.msra.mxu0 %v207
        %380 = vmatprep.subr.mxu0 0.0
        %381 = vmatpush1.msra.mxu0 %v208
        %382 = vmatprep.subr.mxu0 0.0
        %383 = vmatpush1.msra.mxu0 %v209
        %384 = vmatprep.subr.mxu0 0.0
        %385 = vmatpush1.msra.mxu0 %v210
        %386 = vmatprep.subr.mxu0 0.0
        %387 = vmatpush1.msra.mxu0 %v211
        %388 = vmatprep.subr.mxu0 0.0
        %389 = vmatpush1.msra.mxu0 %v212
        %390 = vmatprep.subr.mxu0 0.0
        %391 = vmatpush1.msra.mxu0 %v213
        %392 = vmatprep.subr.mxu0 0.0
        %393 = vmatpush1.msra.mxu0 %v214
        %394 = vmatprep.subr.mxu0 0.0
        %395 = vmatpush1.msra.mxu0 %v215
        %396 = vmatprep.subr.mxu0 0.0
        %397 = vmatpush1.msra.mxu0 %v216
        %398 = vmatprep.subr.mxu0 0.0
        %399 = vmatpush1.msra.mxu0 %v217
        %400 = vmatprep.subr.mxu0 0.0
        %401 = vmatpush1.msra.mxu0 0.0
        %402 = vmatprep.subr.mxu0 0.0
        %403 = vmatpush1.msra.mxu0 0.0
        %404 = vmatprep.subr.mxu0 0.0
        %405 = vmatpush1.msra.mxu0 0.0
        %406 = vmatprep.subr.mxu0 0.0
        %407 = vmatpush1.msra.mxu0 0.0
        %408 = vmatprep.subr.mxu0 0.0
        %409 = vmatpush1.msra.mxu0 0.0
        %410 = vmatprep.subr.mxu0 0.0
        %411 = vmatpush1.msra.mxu0 0.0
        %412 = vmatprep.subr.mxu0 0.0
        %413 = vmatpush1.msra.mxu0 0.0
        %414 = vmatprep.subr.mxu0 0.0
        %415 = vmatpush1.msra.mxu0 0.0
        %416 = vmatprep.subr.mxu0 0.0
        %417 = vmatpush1.msra.mxu0 0.0
        %418 = vmatprep.subr.mxu0 0.0
        %419 = vmatpush1.msra.mxu0 0.0
        %420 = vmatprep.subr.mxu0 0.0
        %421 = vmatpush1.msra.mxu0 0.0
        %422 = vmatprep.subr.mxu0 0.0
        %423 = vmatpush1.msra.mxu0 0.0
        %424 = vmatprep.subr.mxu0 0.0
        %425 = vmatpush1.msra.mxu0 0.0
        %426 = vmatprep.subr.mxu0 0.0
        %427 = vmatpush1.msra.mxu0 0.0
        %428 = vmatprep.subr.mxu0 0.0
        %429 = vmatpush1.msra.mxu0 0.0
        %430 = vmatprep.subr.mxu0 0.0
        %431 = vmatpush1.msra.mxu0 0.0
        %432 = vmatprep.mubr.f32.mxu0 0.0
        %433 = vmatmul.mubr.f32.gmra.mrb[0].mxu0 %v367
        %v434 = vpop.f32.mrb[0].mxu0
        %v435 = vadd.f32 0.0, %v434
        %v436 = vpop.f32.mrb[0].mxu0
        %437 = vdwg.mxu0
        %438 = vst.msk [vmem:[%s188] sm:$0xff] %vm218, %v435
        %s439 = sand.u32 %s115, 1
        %s440 = scalar_lea.sflag [#allocation3], %s439
        %s441 = sand.u32 %s115, 1
        %s442 = smul.addr %s441, 8
        %s443 = scalar_lea.vmem [#allocation2], %s442
        // Predicated region
        $region37: #{tpu_custom_call.1} parent=35 // pred_check
          %p444 = pneg %p125
        $region38: #{tpu_custom_call.1} parent=35 // pred_check_branch
          %446 = sbr.rel (%p444) target = $region40
        $region39: #{tpu_custom_call.1} parent=35 // pred_region
          %s448 = ssub.s32 128, 128
          %449 = vsyncadd %s440, %s448
          %s450 = smul.addr %s18, 128
          %s451 = scalar_lea.hbm %s4, %s450
          %s453 = sshll.u32 %s443, 4
          %s454 = int_to_ptr.vmem [resolvable:$true] %s453
          %456 = dma.vmem_to_hbm [thread:$0]  %s454, 128, %s451, %s440
        $region40: #{tpu_custom_call.1} parent=35 // pred_fallthru
          _
      $region36: #{tpu_custom_call.1} parent=5 // pred_fallthru
        _
      %p457 = scmp.le.s32.totalorder 2, %s13
      // Predicated region
      $region41: #{tpu_custom_call.1} parent=5 // pred_check
        %p458 = pneg %p457
      $region42: #{tpu_custom_call.1} parent=5 // pred_check_branch
        %460 = sbr.rel (%p458) target = $region44
      $region43: #{tpu_custom_call.1} parent=5 // pred_region
        %s461 = ssub.s32 %s13, 2
        // Predicated region
        $region45: #{tpu_custom_call.1} parent=43 // pred_check
          %p462 = pneg %p131
        $region46: #{tpu_custom_call.1} parent=43 // pred_check_branch
          %464 = sbr.rel (%p462) target = $region48
        $region47: #{tpu_custom_call.1} parent=43 // pred_region
          %s465 = sand.u32 %s116, 1
          %s466 = scalar_lea.sflag [#allocation3], %s465
          %s467 = sand.u32 %s116, 1
          %s468 = smul.addr %s467, 8
          %s469 = scalar_lea.vmem [#allocation2], %s468
          %470 = dma.done %s466, 128
        $region48: #{tpu_custom_call.1} parent=43 // pred_fallthru
          _
      $region44: #{tpu_custom_call.1} parent=5 // pred_fallthru
        _
    $region6: #{tpu_custom_call.1} parent=1 // loop_footer
      %s17 = sadd.s32 1, %s13
    $region7: #{tpu_custom_call.1} parent=1 // loop_footer_branch
      %12 = sbr.rel target = $region3
    $region8: #{tpu_custom_call.1} parent=1 // loop_exit
      _
    %471 = vsyncpa [#allocation3], 1
    %s472 = scalar_lea.sflag [#allocation3], 1
    %473 = vsyncpa %s472, 1

</llo_original>
